<compile_context>
chip_gen: v5e
topology: v5e:2x2
jax: 0.10.0
libtpu: 0.0.40
codegen_flags: <defaults>
</compile_context>

<pallas_src>
import functools

import jax
import jax.numpy as jnp
from jax import lax
from jax.experimental import pallas as pl
from jax.experimental.pallas import tpu as pltpu

EPS = 1e-5
DEFAULT_TILE_M = 1024   # rows of M per grid tile (multiple of 8)


def _round_up(n, m):
    return ((n + m - 1) // m) * m


def _vmem_limit_bytes():
    cap = 64 * 1024 * 1024   # conservative default = v7x physical VMEM per TC
    try:
        cap = int(pltpu.get_tpu_info().vmem_capacity_bytes)
    except Exception:
        pass
    return min(48 * 1024 * 1024, (3 * cap) // 4)


def _plan_tiles(M, C_in, c_pad, tile_m, vmem_limit):
    """Pick tile rows, padded M, and whether the conv VMEM cache fits."""
    tm = min(tile_m, _round_up(M, 8))
    tm = max(8, (tm // 8) * 8)

    def stream_bytes(t):
        # double-buffered streamed tiles: (x2 + prev) in, output out
        return 4 * 2 * t * (3 * C_in + c_pad)

    while tm > 8 and stream_bytes(tm) > vmem_limit // 3:
        tm = max(8, ((tm // 2) // 8) * 8)

    # Prefer a tile that divides M exactly: keeps the reshaped-x input a free
    # view (no zero-padding copy) without dropping to overhead-bound tiny tiles.
    if M % tm != 0 and M >= 512:
        t = tm
        while t >= 256 and M % t != 0:
            t -= 8
        if t >= 256 and M % t == 0:
            tm = t

    M_pad = _round_up(M, tm)
    num_tiles = M_pad // tm
    cache_bytes = M_pad * c_pad * 4
    const_bytes = 4 * 2 * (3 * C_in * c_pad + 2 * c_pad)
    use_cache = (cache_bytes + stream_bytes(tm) + const_bytes
                 <= int(0.6 * vmem_limit))
    return tm, M_pad, num_tiles, use_cache


def _convlayer_kernel(x2_ref, prev_ref, w12_ref, w0_ref, gamma_ref, beta_ref,
                      o_ref, sum_ref, sumsq_ref, scale_ref, shift_ref,
                      *maybe_cache, inv_m, cache_conv):
    cache_ref = maybe_cache[0] if cache_conv else None
    phase = pl.program_id(0)   # 0: conv + BN stats, 1: finalize + normalize
    i = pl.program_id(1)       # M-tile index

    def compute_conv():
        # Conv as two MXU GEMMs (taps k=1,2 packed in x2; tap k=0 from prev),
        # accumulated in f32 (in-place MRB accumulation on v7x).
        acc = jnp.dot(x2_ref[...], w12_ref[...],
                      preferred_element_type=jnp.float32)
        acc = acc + jnp.dot(prev_ref[...], w0_ref[...],
                            preferred_element_type=jnp.float32)
        return acc

    @pl.when(jnp.logical_and(phase == 0, i == 0))
    def _init():
        sum_ref[...] = jnp.zeros_like(sum_ref)
        sumsq_ref[...] = jnp.zeros_like(sumsq_ref)

    @pl.when(phase == 0)
    def _stats():
        conv = compute_conv()
        tm = conv.shape[0]
        c = conv.reshape(tm // 8, 8, conv.shape[1])
        sum_ref[...] += jnp.sum(c, axis=0)         # vreg-shaped partial sums:
        sumsq_ref[...] += jnp.sum(c * c, axis=0)   # no XLU sublane reduce/tile
        if cache_conv:
            cache_ref[i] = conv                    # conv computed exactly once

    @pl.when(jnp.logical_and(phase == 1, i == 0))
    def _finalize_stats():
        s = jnp.sum(sum_ref[...], axis=0, keepdims=True)
        ss = jnp.sum(sumsq_ref[...], axis=0, keepdims=True)
        mean = s * inv_m
        # One-pass E[x^2]-mean^2 variance in f32 (clamped); fine for this
        # scale of activations, switch to a two-pass form if |mean| >> std.
        var = jnp.maximum(ss * inv_m - mean * mean, 0.0)
        rstd = lax.rsqrt(var + EPS)                # EUP slot, off the VALU
        scale = gamma_ref[...] * rstd
        scale_ref[...] = scale
        shift_ref[...] = beta_ref[...] - mean * scale

    @pl.when(phase == 1)
    def _normalize():
        conv = cache_ref[i] if cache_conv else compute_conv()
        o_ref[...] = jnp.maximum(conv * scale_ref[...] + shift_ref[...], 0.0)


def conv_layer_forward(x, weight, bias, gamma, beta, *, tile_m=DEFAULT_TILE_M):
    """x: [B, L, C_in] f32. weight: [C_out, C_in, 3] (PyTorch Conv1d layout).
    Returns [B, L_out, C_out] (training-mode BatchNorm + ReLU applied)."""
    del bias  # Conv bias cancels exactly under training-mode BatchNorm.
    x = x.astype(jnp.float32)
    weight = weight.astype(jnp.float32)
    B, L, C_in = x.shape
    C_out = weight.shape[0]
    L_out = (L - 1) // 2 + 1          # kernel=3, stride=2, circular pad=1
    M = B * L_out
    c_pad = _round_up(max(C_out, 1), 128)   # lane-dense output width

    # --- taps without im2col -------------------------------------------------
    # Window t uses input rows 2t-1 (k=0), 2t (k=1), 2t+1 (k=2), circular.
    if L % 2 == 0:
        x2 = x.reshape(M, 2 * C_in)                        # free view: [x[2t]; x[2t+1]]
    else:
        x2 = jnp.concatenate([x, x[:, :1, :]], axis=1).reshape(M, 2 * C_in)
    prev = jnp.roll(x, 1, axis=1)[:, ::2, :].reshape(M, C_in)   # x[2t-1], circular

    vmem_limit = _vmem_limit_bytes()
    tm, M_pad, num_tiles, use_cache = _plan_tiles(M, C_in, c_pad, tile_m, vmem_limit)
    if M_pad != M:   # zero rows give conv = 0 -> BN sums unaffected (bias dropped)
        x2 = jnp.pad(x2, ((0, M_pad - M), (0, 0)))
        prev = jnp.pad(prev, ((0, M_pad - M), (0, 0)))

    # --- lane-dense parameters: pad C_out -> c_pad ---------------------------
    w12 = jnp.concatenate([weight[:, :, 1].T, weight[:, :, 2].T], axis=0)  # [2*C_in, C_out]
    w12_pad = jnp.zeros((2 * C_in, c_pad), jnp.float32).at[:, :C_out].set(w12)
    w0_pad = jnp.zeros((C_in, c_pad), jnp.float32).at[:, :C_out].set(weight[:, :, 0].T)
    g_row = jnp.zeros((1, c_pad), jnp.float32).at[:, :C_out].set(gamma.astype(jnp.float32))
    b_row = jnp.zeros((1, c_pad), jnp.float32).at[:, :C_out].set(beta.astype(jnp.float32))

    last = num_tiles - 1

    def stream_idx(p, i):
        if use_cache:
            # phase 0: tile i; phase 1: hold the last-fetched block -> no DMA.
            return (i * (1 - p) + last * p, 0)
        return (i, 0)   # recompute fallback re-streams the inputs in phase 1

    kernel = functools.partial(_convlayer_kernel, inv_m=float(1.0 / M),
                               cache_conv=use_cache)

    # Scratch: BN partial sums (vreg-shaped), folded scale/shift, conv cache.
    scratch = [pltpu.VMEM((8, c_pad), jnp.float32),
               pltpu.VMEM((8, c_pad), jnp.float32),
               pltpu.VMEM((1, c_pad), jnp.float32),
               pltpu.VMEM((1, c_pad), jnp.float32)]
    if use_cache:
        scratch.append(pltpu.VMEM((num_tiles, tm, c_pad), jnp.float32))

    k_total = 3 * C_in
    gemm_passes = 1 if use_cache else 2
    flops = int(2 * M_pad * k_total * c_pad * gemm_passes + 6 * M_pad * c_pad)
    bytes_accessed = int(4 * M_pad * k_total * gemm_passes
                         + 4 * M_pad * c_pad
                         + 4 * (k_total * c_pad + 2 * c_pad))

    # NOTE: pipeline_mode=pl.Buffered(1) on the constant operands was skipped
    # for compile-safety; their index maps are constant so they are only
    # fetched once anyway.
    out_pad = pl.pallas_call(
        kernel,
        out_shape=jax.ShapeDtypeStruct((M_pad, c_pad), jnp.float32),
        grid_spec=pltpu.PrefetchScalarGridSpec(
            num_scalar_prefetch=0,
            grid=(2, num_tiles),                                   # (phase, M-tile)
            in_specs=[
                pl.BlockSpec((tm, 2 * C_in), stream_idx),          # taps k=1,2
                pl.BlockSpec((tm, C_in), stream_idx),              # tap  k=0
                pl.BlockSpec((2 * C_in, c_pad), lambda p, i: (0, 0)),
                pl.BlockSpec((C_in, c_pad), lambda p, i: (0, 0)),
                pl.BlockSpec((1, c_pad), lambda p, i: (0, 0)),
                pl.BlockSpec((1, c_pad), lambda p, i: (0, 0)),
            ],
            # Block 0 stays resident (never written) through the stats phase;
            # each output block is written exactly once, during phase 1.
            out_specs=pl.BlockSpec((tm, c_pad), lambda p, i: (i * p, 0)),
            scratch_shapes=scratch,
        ),
        compiler_params=pltpu.CompilerParams(
            dimension_semantics=("arbitrary", "arbitrary"),
            vmem_limit_bytes=vmem_limit,
        ),
        cost_estimate=pl.CostEstimate(flops=flops, transcendentals=c_pad,
                                      bytes_accessed=bytes_accessed),
    )(x2, prev, w12_pad, w0_pad, g_row, b_row)

    return out_pad[:M, :C_out].reshape(B, L_out, C_out)


def reference_forward(x, weight, bias, gamma, beta):
    """Independent pure-JAX reference mirroring the PyTorch ops (with bias)."""
    x_ncl = jnp.transpose(x, (0, 2, 1))                       # [B, C_in, L]
    x_pad = jnp.concatenate([x_ncl[:, :, -1:], x_ncl, x_ncl[:, :, :1]], axis=-1)
    conv = lax.conv_general_dilated(
        x_pad, weight, window_strides=(2,), padding="VALID",
        dimension_numbers=("NCH", "OIH", "NCH"))
    conv = conv + bias[None, :, None]                          # [B, C_out, L_out]
    mean = jnp.mean(conv, axis=(0, 2), keepdims=True)
    var = jnp.mean((conv - mean) ** 2, axis=(0, 2), keepdims=True)
    y = (conv - mean) * lax.rsqrt(var + EPS)
    y = y * gamma[None, :, None] + beta[None, :, None]
    y = jnp.maximum(y, 0.0)
    return jnp.transpose(y, (0, 2, 1))                         # [B, L_out, C_out]


if __name__ == "__main__":
    B, L, C_in, C_out = 2, 16, 4, 8

    key = jax.random.PRNGKey(0)
    kx, kw, kb = jax.random.split(key, 3)

    x = jax.random.normal(kx, (B, L, C_in), dtype=jnp.float32)

    # Deterministic parameter init (Conv1d-style uniform bound); BN gamma=1, beta=0.
    bound = 1.0 / jnp.sqrt(jnp.float32(C_in * 3))
    weight = jax.random.uniform(kw, (C_out, C_in, 3), minval=-bound, maxval=bound,
                                dtype=jnp.float32)
    bias = jax.random.uniform(kb, (C_out,), minval=-bound, maxval=bound,
                              dtype=jnp.float32)
    gamma = jnp.ones((C_out,), dtype=jnp.float32)
    beta = jnp.zeros((C_out,), dtype=jnp.float32)

    out = conv_layer_forward(x, weight, bias, gamma, beta)
    out = jax.block_until_ready(out)

    ref = jax.block_until_ready(reference_forward(x, weight, bias, gamma, beta))
    assert out.shape == (B, L // 2, C_out), out.shape
    assert jnp.allclose(out, ref, atol=1e-4, rtol=1e-4), float(jnp.max(jnp.abs(out - ref)))

    print("KERNEL_OK")
</pallas_src>

<mosaic_0001>
module attributes {stable_mosaic.version = 11 : i64} {
  func.func @_convlayer_kernel(%arg0: i32, %arg1: i32, %arg2: memref<16x8xf32, #tpu.memory_space<vmem>>, %arg3: memref<16x4xf32, #tpu.memory_space<vmem>>, %arg4: memref<8x128xf32, #tpu.memory_space<vmem>>, %arg5: memref<4x128xf32, #tpu.memory_space<vmem>>, %arg6: memref<1x128xf32, #tpu.memory_space<vmem>>, %arg7: memref<1x128xf32, #tpu.memory_space<vmem>>, %arg8: memref<16x128xf32, #tpu.memory_space<vmem>>, %arg9: memref<8x128xf32, #tpu.memory_space<vmem>>, %arg10: memref<8x128xf32, #tpu.memory_space<vmem>>, %arg11: memref<1x128xf32, #tpu.memory_space<vmem>>, %arg12: memref<1x128xf32, #tpu.memory_space<vmem>>, %arg13: memref<1x16x128xf32, #tpu.memory_space<vmem>>) attributes {dimension_semantics = [#tpu.dimension_semantics<arbitrary>, #tpu.dimension_semantics<arbitrary>], iteration_bounds = array<i64: 2, 1>, scalar_prefetch = 0 : i64, scratch_operands = 5 : i64, tpu.core_type = #tpu.core_type<tc>, window_params = [{transform_indices = @transform_0, window_bounds = array<i64: 16, 8>}, {transform_indices = @transform_1, window_bounds = array<i64: 16, 4>}, {pipeline_mode = #tpu.pipeline_mode<synchronous>, transform_indices = @transform_2, window_bounds = array<i64: 8, 128>}, {pipeline_mode = #tpu.pipeline_mode<synchronous>, transform_indices = @transform_3, window_bounds = array<i64: 4, 128>}, {pipeline_mode = #tpu.pipeline_mode<synchronous>, transform_indices = @transform_4, window_bounds = array<i64: 1, 128>}, {pipeline_mode = #tpu.pipeline_mode<synchronous>, transform_indices = @transform_5, window_bounds = array<i64: 1, 128>}, {transform_indices = @transform_6, window_bounds = array<i64: 16, 128>}]} {
    %c0_i32 = arith.constant 0 : i32
    %0 = arith.cmpi eq, %arg0, %c0_i32 : i32
    %c0_i32_0 = arith.constant 0 : i32
    %1 = arith.cmpi eq, %arg1, %c0_i32_0 : i32
    %2 = arith.andi %0, %1 : i1
    %3 = arith.extui %2 : i1 to i32
    %c0_i32_1 = arith.constant 0 : i32
    %4 = arith.cmpi ne, %3, %c0_i32_1 : i32
    scf.if %4 {
      %cst = arith.constant 0.000000e+00 : f32
      %16 = vector.broadcast %cst : f32 to vector<8x128xf32>
      %c0 = arith.constant 0 : index
      %c0_8 = arith.constant 0 : index
      %17 = vector.load %arg9[%c0, %c0_8] : memref<8x128xf32, #tpu.memory_space<vmem>>, vector<8x128xf32>
      tpu.vector_store %arg9[%c0, %c0_8], %16 {strides = array<i32>} : memref<8x128xf32, #tpu.memory_space<vmem>>, vector<8x128xf32>,
      %cst_9 = arith.constant 0.000000e+00 : f32
      %18 = vector.broadcast %cst_9 : f32 to vector<8x128xf32>
      %c0_10 = arith.constant 0 : index
      %c0_11 = arith.constant 0 : index
      %19 = vector.load %arg10[%c0_10, %c0_11] : memref<8x128xf32, #tpu.memory_space<vmem>>, vector<8x128xf32>
      tpu.vector_store %arg10[%c0_10, %c0_11], %18 {strides = array<i32>} : memref<8x128xf32, #tpu.memory_space<vmem>>, vector<8x128xf32>,
    } else {
    }
    %c0_i32_2 = arith.constant 0 : i32
    %5 = arith.cmpi eq, %arg0, %c0_i32_2 : i32
    %6 = arith.extui %5 : i1 to i32
    %c0_i32_3 = arith.constant 0 : i32
    %7 = arith.cmpi ne, %6, %c0_i32_3 : i32
    scf.if %7 {
      %c0 = arith.constant 0 : index
      %c0_8 = arith.constant 0 : index
      %16 = vector.load %arg2[%c0, %c0_8] : memref<16x8xf32, #tpu.memory_space<vmem>>, vector<16x8xf32>
      %c0_9 = arith.constant 0 : index
      %c0_10 = arith.constant 0 : index
      %17 = vector.load %arg4[%c0_9, %c0_10] : memref<8x128xf32, #tpu.memory_space<vmem>>, vector<8x128xf32>
      %cst = arith.constant dense<0.000000e+00> : vector<16x128xf32>
      %18 = tpu.matmul %16, %17, %cst {dimension_numbers = #tpu.dot_dimension_numbers<[1], [0], [0], [1], [0, 0, 1, 1], [], []>} : vector<16x8xf32>, vector<8x128xf32>, vector<16x128xf32> -> vector<16x128xf32>
      %c0_11 = arith.constant 0 : index
      %c0_12 = arith.constant 0 : index
      %19 = vector.load %arg3[%c0_11, %c0_12] : memref<16x4xf32, #tpu.memory_space<vmem>>, vector<16x4xf32>
      %c0_13 = arith.constant 0 : index
      %c0_14 = arith.constant 0 : index
      %20 = vector.load %arg5[%c0_13, %c0_14] : memref<4x128xf32, #tpu.memory_space<vmem>>, vector<4x128xf32>
      %cst_15 = arith.constant dense<0.000000e+00> : vector<16x128xf32>
      %21 = tpu.matmul %19, %20, %cst_15 {dimension_numbers = #tpu.dot_dimension_numbers<[1], [0], [0], [1], [0, 0, 1, 1], [], []>} : vector<16x4xf32>, vector<4x128xf32>, vector<16x128xf32> -> vector<16x128xf32>
      %22 = arith.addf %18, %21 : vector<16x128xf32>
      %23 = vector.shape_cast %22 : vector<16x128xf32> to vector<2x8x128xf32>
      %c0_16 = arith.constant 0 : index
      %c0_17 = arith.constant 0 : index
      %24 = vector.load %arg9[%c0_16, %c0_17] : memref<8x128xf32, #tpu.memory_space<vmem>>, vector<8x128xf32>
      %cst_18 = arith.constant dense<0.000000e+00> : vector<8x128xf32>
      %25 = vector.multi_reduction <add>, %23, %cst_18 [0] : vector<2x8x128xf32> to vector<8x128xf32>
      %26 = arith.addf %24, %25 : vector<8x128xf32>
      %c0_19 = arith.constant 0 : index
      %c0_20 = arith.constant 0 : index
      %27 = vector.load %arg9[%c0_19, %c0_20] : memref<8x128xf32, #tpu.memory_space<vmem>>, vector<8x128xf32>
      tpu.vector_store %arg9[%c0_19, %c0_20], %26 {strides = array<i32>} : memref<8x128xf32, #tpu.memory_space<vmem>>, vector<8x128xf32>,
      %c0_21 = arith.constant 0 : index
      %c0_22 = arith.constant 0 : index
      %28 = vector.load %arg10[%c0_21, %c0_22] : memref<8x128xf32, #tpu.memory_space<vmem>>, vector<8x128xf32>
      %29 = arith.mulf %23, %23 : vector<2x8x128xf32>
      %cst_23 = arith.constant dense<0.000000e+00> : vector<8x128xf32>
      %30 = vector.multi_reduction <add>, %29, %cst_23 [0] : vector<2x8x128xf32> to vector<8x128xf32>
      %31 = arith.addf %28, %30 : vector<8x128xf32>
      %c0_24 = arith.constant 0 : index
      %c0_25 = arith.constant 0 : index
      %32 = vector.load %arg10[%c0_24, %c0_25] : memref<8x128xf32, #tpu.memory_space<vmem>>, vector<8x128xf32>
      tpu.vector_store %arg10[%c0_24, %c0_25], %31 {strides = array<i32>} : memref<8x128xf32, #tpu.memory_space<vmem>>, vector<8x128xf32>,
      %33 = arith.index_cast %arg1 : i32 to index
      %c0_26 = arith.constant 0 : index
      %c0_27 = arith.constant 0 : index
      %34 = vector.load %arg13[%33, %c0_26, %c0_27] : memref<1x16x128xf32, #tpu.memory_space<vmem>>, vector<1x16x128xf32>
      %35 = vector.shape_cast %34 : vector<1x16x128xf32> to vector<16x128xf32>
      %36 = vector.shape_cast %22 : vector<16x128xf32> to vector<1x16x128xf32>
      tpu.vector_store %arg13[%33, %c0_26, %c0_27], %36 {strides = array<i32>} : memref<1x16x128xf32, #tpu.memory_space<vmem>>, vector<1x16x128xf32>,
    } else {
    }
    %c1_i32 = arith.constant 1 : i32
    %8 = arith.cmpi eq, %arg0, %c1_i32 : i32
    %c0_i32_4 = arith.constant 0 : i32
    %9 = arith.cmpi eq, %arg1, %c0_i32_4 : i32
    %10 = arith.andi %8, %9 : i1
    %11 = arith.extui %10 : i1 to i32
    %c0_i32_5 = arith.constant 0 : i32
    %12 = arith.cmpi ne, %11, %c0_i32_5 : i32
    scf.if %12 {
      %c0 = arith.constant 0 : index
      %c0_8 = arith.constant 0 : index
      %16 = vector.load %arg9[%c0, %c0_8] : memref<8x128xf32, #tpu.memory_space<vmem>>, vector<8x128xf32>
      %cst = arith.constant dense<0.000000e+00> : vector<128xf32>
      %17 = vector.multi_reduction <add>, %16, %cst [0] : vector<8x128xf32> to vector<128xf32>
      %18 = vector.shape_cast %17 : vector<128xf32> to vector<1x128xf32>
      %c0_9 = arith.constant 0 : index
      %c0_10 = arith.constant 0 : index
      %19 = vector.load %arg10[%c0_9, %c0_10] : memref<8x128xf32, #tpu.memory_space<vmem>>, vector<8x128xf32>
      %cst_11 = arith.constant dense<0.000000e+00> : vector<128xf32>
      %20 = vector.multi_reduction <add>, %19, %cst_11 [0] : vector<8x128xf32> to vector<128xf32>
      %21 = vector.shape_cast %20 : vector<128xf32> to vector<1x128xf32>
      %cst_12 = arith.constant 6.250000e-02 : f32
      %22 = vector.broadcast %cst_12 : f32 to vector<1x128xf32>
      %23 = arith.mulf %18, %22 : vector<1x128xf32>
      %cst_13 = arith.constant 6.250000e-02 : f32
      %24 = vector.broadcast %cst_13 : f32 to vector<1x128xf32>
      %25 = arith.mulf %21, %24 : vector<1x128xf32>
      %26 = arith.mulf %23, %23 : vector<1x128xf32>
      %27 = arith.subf %25, %26 : vector<1x128xf32>
      %cst_14 = arith.constant 0.000000e+00 : f32
      %28 = vector.broadcast %cst_14 : f32 to vector<1x128xf32>
      %29 = arith.maximumf %27, %28 : vector<1x128xf32>
      %cst_15 = arith.constant 9.99999974E-6 : f32
      %30 = vector.broadcast %cst_15 : f32 to vector<1x128xf32>
      %31 = arith.addf %29, %30 : vector<1x128xf32>
      %32 = math.rsqrt %31 : vector<1x128xf32>
      %c0_16 = arith.constant 0 : index
      %c0_17 = arith.constant 0 : index
      %33 = vector.load %arg6[%c0_16, %c0_17] : memref<1x128xf32, #tpu.memory_space<vmem>>, vector<1x128xf32>
      %34 = arith.mulf %33, %32 : vector<1x128xf32>
      %c0_18 = arith.constant 0 : index
      %c0_19 = arith.constant 0 : index
      %35 = vector.load %arg11[%c0_18, %c0_19] : memref<1x128xf32, #tpu.memory_space<vmem>>, vector<1x128xf32>
      tpu.vector_store %arg11[%c0_18, %c0_19], %34 {strides = array<i32>} : memref<1x128xf32, #tpu.memory_space<vmem>>, vector<1x128xf32>,
      %c0_20 = arith.constant 0 : index
      %c0_21 = arith.constant 0 : index
      %36 = vector.load %arg7[%c0_20, %c0_21] : memref<1x128xf32, #tpu.memory_space<vmem>>, vector<1x128xf32>
      %37 = arith.mulf %23, %34 : vector<1x128xf32>
      %38 = arith.subf %36, %37 : vector<1x128xf32>
      %c0_22 = arith.constant 0 : index
      %c0_23 = arith.constant 0 : index
      %39 = vector.load %arg12[%c0_22, %c0_23] : memref<1x128xf32, #tpu.memory_space<vmem>>, vector<1x128xf32>
      tpu.vector_store %arg12[%c0_22, %c0_23], %38 {strides = array<i32>} : memref<1x128xf32, #tpu.memory_space<vmem>>, vector<1x128xf32>,
    } else {
    }
    %c1_i32_6 = arith.constant 1 : i32
    %13 = arith.cmpi eq, %arg0, %c1_i32_6 : i32
    %14 = arith.extui %13 : i1 to i32
    %c0_i32_7 = arith.constant 0 : i32
    %15 = arith.cmpi ne, %14, %c0_i32_7 : i32
    scf.if %15 {
      %16 = arith.index_cast %arg1 : i32 to index
      %c0 = arith.constant 0 : index
      %c0_8 = arith.constant 0 : index
      %17 = vector.load %arg13[%16, %c0, %c0_8] : memref<1x16x128xf32, #tpu.memory_space<vmem>>, vector<1x16x128xf32>
      %18 = vector.shape_cast %17 : vector<1x16x128xf32> to vector<16x128xf32>
      %c0_9 = arith.constant 0 : index
      %c0_10 = arith.constant 0 : index
      %19 = vector.load %arg11[%c0_9, %c0_10] : memref<1x128xf32, #tpu.memory_space<vmem>>, vector<1x128xf32>
      %20 = vector.broadcast %19 : vector<1x128xf32> to vector<16x128xf32>
      %21 = arith.mulf %18, %20 : vector<16x128xf32>
      %c0_11 = arith.constant 0 : index
      %c0_12 = arith.constant 0 : index
      %22 = vector.load %arg12[%c0_11, %c0_12] : memref<1x128xf32, #tpu.memory_space<vmem>>, vector<1x128xf32>
      %23 = vector.broadcast %22 : vector<1x128xf32> to vector<16x128xf32>
      %24 = arith.addf %21, %23 : vector<16x128xf32>
      %cst = arith.constant 0.000000e+00 : f32
      %25 = vector.broadcast %cst : f32 to vector<16x128xf32>
      %26 = arith.maximumf %24, %25 : vector<16x128xf32>
      %c0_13 = arith.constant 0 : index
      %c0_14 = arith.constant 0 : index
      %27 = vector.load %arg8[%c0_13, %c0_14] : memref<16x128xf32, #tpu.memory_space<vmem>>, vector<16x128xf32>
      tpu.vector_store %arg8[%c0_13, %c0_14], %26 {strides = array<i32>} : memref<16x128xf32, #tpu.memory_space<vmem>>, vector<16x128xf32>,
    } else {
    }
    return
  }
  func.func @transform_0(%arg0: i32, %arg1: i32) -> (i32, i32) {
    %c1_i32 = arith.constant 1 : i32
    %0 = arith.subi %c1_i32, %arg0 : i32
    %1 = arith.muli %arg1, %0 : i32
    %c0_i32 = arith.constant 0 : i32
    %2 = arith.muli %c0_i32, %arg0 : i32
    %3 = arith.addi %1, %2 : i32
    %c0_i32_0 = arith.constant 0 : i32
    %c0_i32_1 = arith.constant 0 : i32
    return %3, %c0_i32_0 : i32, i32
  }
  func.func @transform_1(%arg0: i32, %arg1: i32) -> (i32, i32) {
    %c1_i32 = arith.constant 1 : i32
    %0 = arith.subi %c1_i32, %arg0 : i32
    %1 = arith.muli %arg1, %0 : i32
    %c0_i32 = arith.constant 0 : i32
    %2 = arith.muli %c0_i32, %arg0 : i32
    %3 = arith.addi %1, %2 : i32
    %c0_i32_0 = arith.constant 0 : i32
    %c0_i32_1 = arith.constant 0 : i32
    return %3, %c0_i32_0 : i32, i32
  }
  func.func @transform_2(%arg0: i32, %arg1: i32) -> (i32, i32) {
    %c0_i32 = arith.constant 0 : i32
    %c0_i32_0 = arith.constant 0 : i32
    %c0_i32_1 = arith.constant 0 : i32
    return %c0_i32, %c0_i32_0 : i32, i32
  }
  func.func @transform_3(%arg0: i32, %arg1: i32) -> (i32, i32) {
    %c0_i32 = arith.constant 0 : i32
    %c0_i32_0 = arith.constant 0 : i32
    %c0_i32_1 = arith.constant 0 : i32
    return %c0_i32, %c0_i32_0 : i32, i32
  }
  func.func @transform_4(%arg0: i32, %arg1: i32) -> (i32, i32) {
    %c0_i32 = arith.constant 0 : i32
    %c0_i32_0 = arith.constant 0 : i32
    %c0_i32_1 = arith.constant 0 : i32
    return %c0_i32, %c0_i32_0 : i32, i32
  }
  func.func @transform_5(%arg0: i32, %arg1: i32) -> (i32, i32) {
    %c0_i32 = arith.constant 0 : i32
    %c0_i32_0 = arith.constant 0 : i32
    %c0_i32_1 = arith.constant 0 : i32
    return %c0_i32, %c0_i32_0 : i32, i32
  }
  func.func @transform_6(%arg0: i32, %arg1: i32) -> (i32, i32) {
    %0 = arith.muli %arg1, %arg0 : i32
    %c0_i32 = arith.constant 0 : i32
    %c0_i32_0 = arith.constant 0 : i32
    return %0, %c0_i32 : i32, i32
  }
}

</mosaic_0001>

<llo_original>
// kernel: tpu_custom_call.1
$region0: #{tpu_custom_call.1}
  #allocation0 [shape = 'u32[]', space=smem, size = 0x4, offset = 0x4, fixed_abs, tag = 'smem constant byte address 0x4 - core index']
  #allocation1 [shape = 'u32[72,128]{1,0:T(1,128)}', space=vmem, size = 0x9000, scoped, tag = 'internal scratch']
  #allocation2 [shape = 'f32[8,128]{1,0:T(8,128)}', space=vmem, size = 0x1000, scoped, tag = 'scratch operand']
  #allocation3 [shape = 'f32[8,128]{1,0:T(8,128)}', space=vmem, size = 0x1000, scoped, tag = 'scratch operand']
  #allocation4 [shape = 'f32[1,128]{1,0:T(1,128)}', space=vmem, size = 0x200, scoped, tag = 'scratch operand']
  #allocation5 [shape = 'f32[1,128]{1,0:T(1,128)}', space=vmem, size = 0x200, scoped, tag = 'scratch operand']
  #allocation6 [shape = 'f32[1,16,128]{2,1,0:T(8,128)}', space=vmem, size = 0x2000, scoped, tag = 'scratch operand']
  %s0 = inlined_call_operand.vmem [shape: f32[16,8], index: 0, kind: input, shape index: {}]
  %s1 = inlined_call_operand.vmem [shape: f32[16,4], index: 1, kind: input, shape index: {}]
  %s2 = inlined_call_operand.vmem [shape: f32[8,128], index: 2, kind: input, shape index: {}]
  %s3 = inlined_call_operand.vmem [shape: f32[4,128], index: 3, kind: input, shape index: {}]
  %s4 = inlined_call_operand.vmem [shape: f32[1,128], index: 4, kind: input, shape index: {}]
  %s5 = inlined_call_operand.vmem [shape: f32[1,128], index: 5, kind: input, shape index: {}]
  %s6 = inlined_call_operand.hbm [shape: f32[16,128], index: 6, kind: output, shape index: {}]
  %s7 = sld [smem:[#allocation0]]
  $region73: #{tpu_custom_call.1} parent=0
    _
  %s9 = ssub.s32 1, %s7
  %s10 = scalar_select 0, %s9, %s7
  $region1: #{tpu_custom_call.1} parent=0
    #allocation7 [shape = 'u8[16384]{0}', space=vmem, size = 0x4000, scoped, tag = 'output window, operand 0']
    #allocation8 [shape = 's32[2]{0}', space=sflag, size = 0x8, scoped, tag = 'scoped memory for tpu_custom_call.1']
    %11 = vsyncpa [#allocation8], 0
    %s12 = scalar_lea.sflag [#allocation8], 1
    %13 = vsyncpa %s12, 0
    loop: start=0, step=1, limit=4
    $region2: #{tpu_custom_call.1} parent=1 // loop_pre_header
      _
    $region3: #{tpu_custom_call.1} parent=1 // loop_header
      %s15 = sphi 0, %s19
      %p16 = scmp.ge.s32.totalorder %s15, 4
      %s22 = sphi 0, %s34
      %s23 = sphi 0, %s30
      %s24 = sphi 0, %s22
      %s25 = sphi 0, %s23
      %s26 = sphi 0, %s24
      %s27 = sphi 0, %s25
      %s41 = sphi 0, %s43
      %s44 = sphi 0, %s41
      %s45 = sphi 0, %s44
      %s61 = sphi 0, %s45
      %s71 = sphi 0, %s73
      %s74 = sphi 0, %s71
      %s75 = sphi 0, %s74
      %s91 = sphi 0, %s75
      %s95 = sphi 0, %s95
      %s97 = sphi 0, %s95
      %s98 = sphi 0, %s97
      %s112 = sphi 0, %s98
      %s116 = sphi 0, %s116
      %s118 = sphi 0, %s116
      %s119 = sphi 0, %s118
      %s133 = sphi 0, %s119
      %s137 = sphi 0, %s137
      %s139 = sphi 0, %s137
      %s140 = sphi 0, %s139
      %s154 = sphi 0, %s140
      %s158 = sphi 0, %s158
      %s160 = sphi 0, %s158
      %s161 = sphi 0, %s160
      %s175 = sphi 0, %s161
      %s183 = sphi 0, %s185
      %s186 = sphi 0, %s183
      %s187 = sphi 0, %s186
      %s203 = sphi 0, %s187
    $region4: #{tpu_custom_call.1} parent=1 // loop_header_branch
      %18 = sbr.rel (%p16) target = $region8
    $region5: #{tpu_custom_call.1} parent=1 // loop_body
      %s20 = ssub.s32 %s15, 1
      %s21 = ssub.s32 %s15, 2
      %s28 = sadd.s32 1, %s23
      %p29 = scmp.ge.s32.totalorder %s28, 1
      %s30 = scalar_select %p29, 0, %s28
      %s31 = sadd.s32 1, %s22
      %s32 = scalar_select %p29, %s31, %s22
      %p33 = scmp.ge.s32.totalorder %s32, 2
      %s34 = scalar_select %p33, 0, %s32
      %s35 = ssub.s32 1, %s22
      %s36 = smul.u32 %s23, %s35
      %s37 = ssub.s32 1, %s34
      %s38 = smul.u32 %s30, %s37
      %s39 = ssub.s32 %s36, %s38
      %p40 = scmp.eq.s32.totalorder %s39, 0
      %s42 = sadd.s32 %s41, 1
      %s43 = scalar_select %p40, %s41, %s42
      %p46 = pneg %p40
      %p47 = scmp.eq.s32.totalorder %s15, 1
      %p48 = por %p46, %p47
      %p49 = scmp.ne.s32.totalorder %s41, %s44
      %p50 = scmp.eq.s32.totalorder %s15, 0
      %p51 = por %p49, %p50
      %p52 = scmp.ne.s32.totalorder %s41, %s44
      %p53 = scmp.eq.s32.totalorder %s20, 1
      %p54 = por %p52, %p53
      %p55 = scmp.ne.s32.totalorder %s44, %s45
      %p56 = scmp.eq.s32.totalorder %s20, 0
      %p57 = por %p55, %p56
      %p58 = scmp.ne.s32.totalorder %s44, %s45
      %p59 = scmp.eq.s32.totalorder %s21, 1
      %p60 = por %p58, %p59
      %p62 = scmp.ne.s32.totalorder %s45, %s61
      %p63 = scmp.eq.s32.totalorder %s21, 0
      %p64 = por %p62, %p63
      %s65 = ssub.s32 1, %s22
      %s66 = smul.u32 %s23, %s65
      %s67 = ssub.s32 1, %s34
      %s68 = smul.u32 %s30, %s67
      %s69 = ssub.s32 %s66, %s68
      %p70 = scmp.eq.s32.totalorder %s69, 0
      %s72 = sadd.s32 %s71, 1
      %s73 = scalar_select %p70, %s71, %s72
      %p76 = pneg %p70
      %p77 = scmp.eq.s32.totalorder %s15, 1
      %p78 = por %p76, %p77
      %p79 = scmp.ne.s32.totalorder %s71, %s74
      %p80 = scmp.eq.s32.totalorder %s15, 0
      %p81 = por %p79, %p80
      %p82 = scmp.ne.s32.totalorder %s71, %s74
      %p83 = scmp.eq.s32.totalorder %s20, 1
      %p84 = por %p82, %p83
      %p85 = scmp.ne.s32.totalorder %s74, %s75
      %p86 = scmp.eq.s32.totalorder %s20, 0
      %p87 = por %p85, %p86
      %p88 = scmp.ne.s32.totalorder %s74, %s75
      %p89 = scmp.eq.s32.totalorder %s21, 1
      %p90 = por %p88, %p89
      %p92 = scmp.ne.s32.totalorder %s75, %s91
      %p93 = scmp.eq.s32.totalorder %s21, 0
      %p94 = por %p92, %p93
      %s96 = sadd.s32 %s95, 1
      %p99 = scmp.eq.s32.totalorder %s15, 1
      %p100 = scmp.ne.s32.totalorder %s95, %s97
      %p101 = scmp.eq.s32.totalorder %s15, 0
      %p102 = por %p100, %p101
      %p103 = scmp.ne.s32.totalorder %s95, %s97
      %p104 = scmp.eq.s32.totalorder %s20, 1
      %p105 = por %p103, %p104
      %p106 = scmp.ne.s32.totalorder %s97, %s98
      %p107 = scmp.eq.s32.totalorder %s20, 0
      %p108 = por %p106, %p107
      %p109 = scmp.ne.s32.totalorder %s97, %s98
      %p110 = scmp.eq.s32.totalorder %s21, 1
      %p111 = por %p109, %p110
      %p113 = scmp.ne.s32.totalorder %s98, %s112
      %p114 = scmp.eq.s32.totalorder %s21, 0
      %p115 = por %p113, %p114
      %s117 = sadd.s32 %s116, 1
      %p120 = scmp.eq.s32.totalorder %s15, 1
      %p121 = scmp.ne.s32.totalorder %s116, %s118
      %p122 = scmp.eq.s32.totalorder %s15, 0
      %p123 = por %p121, %p122
      %p124 = scmp.ne.s32.totalorder %s116, %s118
      %p125 = scmp.eq.s32.totalorder %s20, 1
      %p126 = por %p124, %p125
      %p127 = scmp.ne.s32.totalorder %s118, %s119
      %p128 = scmp.eq.s32.totalorder %s20, 0
      %p129 = por %p127, %p128
      %p130 = scmp.ne.s32.totalorder %s118, %s119
      %p131 = scmp.eq.s32.totalorder %s21, 1
      %p132 = por %p130, %p131
      %p134 = scmp.ne.s32.totalorder %s119, %s133
      %p135 = scmp.eq.s32.totalorder %s21, 0
      %p136 = por %p134, %p135
      %s138 = sadd.s32 %s137, 1
      %p141 = scmp.eq.s32.totalorder %s15, 1
      %p142 = scmp.ne.s32.totalorder %s137, %s139
      %p143 = scmp.eq.s32.totalorder %s15, 0
      %p144 = por %p142, %p143
      %p145 = scmp.ne.s32.totalorder %s137, %s139
      %p146 = scmp.eq.s32.totalorder %s20, 1
      %p147 = por %p145, %p146
      %p148 = scmp.ne.s32.totalorder %s139, %s140
      %p149 = scmp.eq.s32.totalorder %s20, 0
      %p150 = por %p148, %p149
      %p151 = scmp.ne.s32.totalorder %s139, %s140
      %p152 = scmp.eq.s32.totalorder %s21, 1
      %p153 = por %p151, %p152
      %p155 = scmp.ne.s32.totalorder %s140, %s154
      %p156 = scmp.eq.s32.totalorder %s21, 0
      %p157 = por %p155, %p156
      %s159 = sadd.s32 %s158, 1
      %p162 = scmp.eq.s32.totalorder %s15, 1
      %p163 = scmp.ne.s32.totalorder %s158, %s160
      %p164 = scmp.eq.s32.totalorder %s15, 0
      %p165 = por %p163, %p164
      %p166 = scmp.ne.s32.totalorder %s158, %s160
      %p167 = scmp.eq.s32.totalorder %s20, 1
      %p168 = por %p166, %p167
      %p169 = scmp.ne.s32.totalorder %s160, %s161
      %p170 = scmp.eq.s32.totalorder %s20, 0
      %p171 = por %p169, %p170
      %p172 = scmp.ne.s32.totalorder %s160, %s161
      %p173 = scmp.eq.s32.totalorder %s21, 1
      %p174 = por %p172, %p173
      %p176 = scmp.ne.s32.totalorder %s161, %s175
      %p177 = scmp.eq.s32.totalorder %s21, 0
      %p178 = por %p176, %p177
      %s179 = smul.u32 %s23, %s22
      %s180 = smul.u32 %s30, %s34
      %s181 = ssub.s32 %s179, %s180
      %p182 = scmp.eq.s32.totalorder %s181, 0
      %s184 = sadd.s32 %s183, 1
      %s185 = scalar_select %p182, %s183, %s184
      %p188 = pneg %p182
      %p189 = scmp.eq.s32.totalorder %s15, 1
      %p190 = por %p188, %p189
      %p191 = scmp.ne.s32.totalorder %s183, %s186
      %p192 = scmp.eq.s32.totalorder %s15, 0
      %p193 = por %p191, %p192
      %p194 = scmp.ne.s32.totalorder %s183, %s186
      %p195 = scmp.eq.s32.totalorder %s20, 1
      %p196 = por %p194, %p195
      %p197 = scmp.ne.s32.totalorder %s186, %s187
      %p198 = scmp.eq.s32.totalorder %s20, 0
      %p199 = por %p197, %p198
      %p200 = scmp.ne.s32.totalorder %s186, %s187
      %p201 = scmp.eq.s32.totalorder %s21, 1
      %p202 = por %p200, %p201
      %p204 = scmp.ne.s32.totalorder %s187, %s203
      %p205 = scmp.eq.s32.totalorder %s21, 0
      %p206 = por %p204, %p205
      %p207 = scmp.le.s32.totalorder 1, %s15
      %p208 = scmp.lt.s32.totalorder %s15, 3
      %p209 = pnand %p207, %p208
      %p210 = pneg %p209
      // Predicated region
      $region9: #{tpu_custom_call.1} parent=5 // pred_check
        _
      $region10: #{tpu_custom_call.1} parent=5 // pred_check_branch
        %212 = sbr.rel (%p209) target = $region12
      $region11: #{tpu_custom_call.1} parent=5 // pred_region
        %s213 = ssub.s32 %s15, 1
        // Predicated region
        $region13: #{tpu_custom_call.1} parent=11 // pred_check
          %p214 = pneg %p108
        $region14: #{tpu_custom_call.1} parent=11 // pred_check_branch
          %216 = sbr.rel (%p214) target = $region16
        $region15: #{tpu_custom_call.1} parent=11 // pred_region
          _
        $region16: #{tpu_custom_call.1} parent=11 // pred_fallthru
          _
        // Predicated region
        $region17: #{tpu_custom_call.1} parent=11 // pred_check
          %p217 = pneg %p129
        $region18: #{tpu_custom_call.1} parent=11 // pred_check_branch
          %219 = sbr.rel (%p217) target = $region20
        $region19: #{tpu_custom_call.1} parent=11 // pred_region
          _
        $region20: #{tpu_custom_call.1} parent=11 // pred_fallthru
          _
        // Predicated region
        $region21: #{tpu_custom_call.1} parent=11 // pred_check
          %p220 = pneg %p150
        $region22: #{tpu_custom_call.1} parent=11 // pred_check_branch
          %222 = sbr.rel (%p220) target = $region24
        $region23: #{tpu_custom_call.1} parent=11 // pred_region
          _
        $region24: #{tpu_custom_call.1} parent=11 // pred_fallthru
          _
        // Predicated region
        $region25: #{tpu_custom_call.1} parent=11 // pred_check
          %p223 = pneg %p171
        $region26: #{tpu_custom_call.1} parent=11 // pred_check_branch
          %225 = sbr.rel (%p223) target = $region28
        $region27: #{tpu_custom_call.1} parent=11 // pred_region
          _
        $region28: #{tpu_custom_call.1} parent=11 // pred_fallthru
          _
      $region12: #{tpu_custom_call.1} parent=5 // pred_fallthru
        _
      %p226 = scmp.lt.s32.totalorder %s15, 2
      // Predicated region
      $region29: #{tpu_custom_call.1} parent=5 // pred_check
        %p227 = pneg %p226
      $region30: #{tpu_custom_call.1} parent=5 // pred_check_branch
        %229 = sbr.rel (%p227) target = $region32
      $region31: #{tpu_custom_call.1} parent=5 // pred_region
        // Predicated region
        $region33: #{tpu_custom_call.1} parent=31 // pred_check
          %p230 = pneg %p51
        $region34: #{tpu_custom_call.1} parent=31 // pred_check_branch
          %232 = sbr.rel (%p230) target = $region36
        $region35: #{tpu_custom_call.1} parent=31 // pred_region
          %s233 = ssub.s32 1, %s22
          %s234 = smul.u32 %s23, %s233
          %s235 = smul.u32 2, %s234
          %p236 = scmp.lt.s32.totalorder %s235, 1
          %s237 = scalar_select %p236, %s235, 1
          %s238 = smul.addr %s237, 8
          %s239 = scalar_lea.vmem %s0, %s238
          %s240 = ssub.s32 1, %s22
          %s241 = smul.u32 %s23, %s240
          %s242 = smul.u32 2, %s241
        $region36: #{tpu_custom_call.1} parent=31 // pred_fallthru
          _
        // Predicated region
        $region37: #{tpu_custom_call.1} parent=31 // pred_check
          %p243 = pneg %p81
        $region38: #{tpu_custom_call.1} parent=31 // pred_check_branch
          %245 = sbr.rel (%p243) target = $region40
        $region39: #{tpu_custom_call.1} parent=31 // pred_region
          %s246 = ssub.s32 1, %s22
          %s247 = smul.u32 %s23, %s246
          %s248 = smul.u32 2, %s247
          %p249 = scmp.lt.s32.totalorder %s248, 1
          %s250 = scalar_select %p249, %s248, 1
          %s251 = smul.addr %s250, 8
          %s252 = scalar_lea.vmem %s1, %s251
          %s253 = ssub.s32 1, %s22
          %s254 = smul.u32 %s23, %s253
          %s255 = smul.u32 2, %s254
        $region40: #{tpu_custom_call.1} parent=31 // pred_fallthru
          _
      $region32: #{tpu_custom_call.1} parent=5 // pred_fallthru
        _
      %p256 = scmp.le.s32.totalorder 1, %s15
      %p257 = scmp.lt.s32.totalorder %s15, 3
      %p258 = pnand %p256, %p257
      %p259 = pneg %p258
      // Predicated region
      $region41: #{tpu_custom_call.1} parent=5 // pred_check
        _
      $region42: #{tpu_custom_call.1} parent=5 // pred_check_branch
        %261 = sbr.rel (%p258) target = $region44
      $region43: #{tpu_custom_call.1} parent=5 // pred_region
        %s262 = ssub.s32 %s15, 1
        %s263 = ssub.s32 1, %s24
        %s264 = smul.u32 %s25, %s263
        %s265 = smul.u32 2, %s264
        %p266 = scmp.lt.s32.totalorder %s265, 1
        %s267 = scalar_select %p266, %s265, 1
        %s268 = smul.addr %s267, 8
        %s269 = scalar_lea.vmem %s0, %s268
        %p270 = pneg %p57
        %p271 = pneg %p54
        %s272 = ssub.s32 1, %s24
        %s273 = smul.u32 %s25, %s272
        %s274 = smul.u32 2, %s273
        %p275 = scmp.lt.s32.totalorder %s274, 1
        %s276 = scalar_select %p275, %s274, 1
        %s277 = smul.addr %s276, 8
        %s278 = scalar_lea.vmem %s1, %s277
        %p279 = pneg %p87
        %p280 = pneg %p84
        %p281 = pneg %p108
        %p282 = pneg %p105
        %p283 = pneg %p129
        %p284 = pneg %p126
        %p285 = pneg %p150
        %p286 = pneg %p147
        %p287 = pneg %p171
        %p288 = pneg %p168
        %p289 = pneg %p199
        %p290 = pneg %p196
        %s291 = sand.u32 %s186, 1
        %s292 = scalar_lea.sflag [#allocation8], %s291
        %s293 = sand.u32 %s186, 1
        %s294 = smul.addr %s293, 16
        %s295 = scalar_lea.vmem [#allocation7], %s294
        %s296 = ssub.s32 1, %s24
        %s297 = smul.u32 %s25, %s296
        %s298 = smul.u32 2, %s297
        %p299 = scmp.lt.s32.totalorder %s298, 1
        %s300 = scalar_select %p299, %s298, 1
        %s301 = smul.addr %s300, 8
        %s302 = scalar_lea.vmem %s0, %s301
        %s303 = ssub.s32 1, %s24
        %s304 = smul.u32 %s25, %s303
        %s305 = smul.u32 2, %s304
        %s306 = ssub.s32 1, %s24
        %s307 = smul.u32 %s25, %s306
        %s308 = smul.u32 2, %s307
        %p309 = scmp.lt.s32.totalorder %s308, 1
        %s310 = scalar_select %p309, %s308, 1
        %s311 = smul.addr %s310, 8
        %s312 = scalar_lea.vmem %s1, %s311
        %s313 = ssub.s32 1, %s24
        %s314 = smul.u32 %s25, %s313
        %s315 = smul.u32 2, %s314
        %s316 = smul.u32 %s25, %s24
        %s317 = smul.u32 2, %s316
        %p318 = scmp.eq.s32.totalorder %s24, 0
        %p319 = scmp.eq.s32.totalorder %s25, 0
        %p320 = pnand %p318, %p319
        %p321 = pneg %p320
        // Predicated region
        $region45: #{tpu_custom_call.1} parent=43 // pred_check
          _
        $region46: #{tpu_custom_call.1} parent=43 // pred_check_branch
          %323 = sbr.rel (%p320) target = $region48
        $region47: #{tpu_custom_call.1} parent=43 // pred_region
          %324 = vst [vmem:[#allocation2] sm:$0xff] 0.0
          %325 = vst [vmem:[#allocation3] sm:$0xff] 0.0
        $region48: #{tpu_custom_call.1} parent=43 // pred_fallthru
          _
        // Predicated region
        $region49: #{tpu_custom_call.1} parent=43 // pred_check
          %p326 = pneg %p318
        $region50: #{tpu_custom_call.1} parent=43 // pred_check_branch
          %328 = sbr.rel (%p326) target = $region52
        $region51: #{tpu_custom_call.1} parent=43 // pred_region
          %v329 = vld [vmem:[%s302] sm:$0xff]
          %v330 = vld [vmem:[%s302 + $0x8] sm:$0xff]
          %v331 = vld [vmem:[%s2] sm:$0xff]
          %v332 = vld [vmem:[%s312] sm:$0xff]
          %v333 = vld [vmem:[%s312 + $0x8] sm:$0xff]
          %v334 = vld [vmem:[%s3] sm:$0xf]
          %vm335 = vcmask 31744
          %v337 = vsel %vm335, %v332, 0
          %v340 = vsel %vm335, %v333, 0
          %vm342 = vcmask 1043456
          %v344 = vsel %vm342, %v334, 0
          %346 = vmatpush.msra.mxu0 0.0
          %347 = vmatpush.msra.mxu0 0.0
          %348 = vmatpush.msra.mxu0 0.0
          %349 = vmatpush.msra.mxu0 0.0
          %350 = vmatpush.msra.mxu0 0.0
          %351 = vmatpush.msra.mxu0 0.0
          %352 = vmatpush.msra.mxu0 0.0
          %353 = vmatpush.msra.mxu0 0.0
          %354 = vmatpush.msra.mxu0 0.0
          %355 = vmatpush.msra.mxu0 0.0
          %356 = vmatpush.msra.mxu0 0.0
          %357 = vmatpush.msra.mxu0 0.0
          %358 = vmatpush.msra.mxu0 0.0
          %359 = vmatpush.msra.mxu0 0.0
          %360 = vmatpush.msra.mxu0 0.0
          %361 = vmatpush.msra.mxu0 %v344
          %362 = vmatmul.f32.gmra.mxu0 %v337
          %v363 = vpop.f32.mrf.mxu0
          %v364 = vadd.f32 0.0, %v363
          %365 = vmatmul.f32.gmra.mxu0 %v340
          %v366 = vpop.f32.mrf.mxu0
          %v367 = vadd.f32 0.0, %v366
          %368 = vdwg.mxu0
          %vm369 = vcmask 64512
          %v371 = vsel %vm369, %v329, 0
          %v374 = vsel %vm369, %v330, 0
          %376 = vmatpush.msra.mxu0 0.0
          %377 = vmatpush.msra.mxu0 0.0
          %378 = vmatpush.msra.mxu0 0.0
          %379 = vmatpush.msra.mxu0 0.0
          %380 = vmatpush.msra.mxu0 0.0
          %381 = vmatpush.msra.mxu0 0.0
          %382 = vmatpush.msra.mxu0 0.0
          %383 = vmatpush.msra.mxu0 0.0
          %384 = vmatpush.msra.mxu0 0.0
          %385 = vmatpush.msra.mxu0 0.0
          %386 = vmatpush.msra.mxu0 0.0
          %387 = vmatpush.msra.mxu0 0.0
          %388 = vmatpush.msra.mxu0 0.0
          %389 = vmatpush.msra.mxu0 0.0
          %390 = vmatpush.msra.mxu0 0.0
          %391 = vmatpush.msra.mxu0 %v331
          %392 = vmatmul.f32.gmra.mxu0 %v371
          %v393 = vpop.f32.mrf.mxu0
          %v394 = vadd.f32 %v364, %v393
          %395 = vmatmul.f32.gmra.mxu0 %v374
          %v396 = vpop.f32.mrf.mxu0
          %v397 = vadd.f32 %v367, %v396
          %398 = vdwg.mxu0
          %v399 = vld [vmem:[#allocation2] sm:$0xff]
          %v400 = vadd.f32 %v394, %v397
          %v401 = vadd.f32 %v399, %v400
          %402 = vst [vmem:[#allocation2] sm:$0xff] %v401
          %v403 = vld [vmem:[#allocation3] sm:$0xff]
          %v404 = vmul.f32 %v394, %v394
          %v405 = vmul.f32 %v397, %v397
          %v406 = vadd.f32 %v404, %v405
          %v407 = vadd.f32 %v403, %v406
          %408 = vst [vmem:[#allocation3] sm:$0xff] %v407
          %s409 = smul.u32 %s25, 16
          %s410 = scalar_lea.vmem [#allocation6], %s409
          %411 = vst [vmem:[%s410] sm:$0xff] %v394
          %412 = vst [vmem:[%s410 + $0x8] sm:$0xff] %v397
        $region52: #{tpu_custom_call.1} parent=43 // pred_fallthru
          _
        %p413 = scmp.eq.s32.totalorder %s24, 1
        %p414 = pnand %p413, %p319
        %p415 = pneg %p414
        // Predicated region
        $region53: #{tpu_custom_call.1} parent=43 // pred_check
          _
        $region54: #{tpu_custom_call.1} parent=43 // pred_check_branch
          %417 = sbr.rel (%p414) target = $region56
        $region55: #{tpu_custom_call.1} parent=43 // pred_region
          %v418 = vld [vmem:[#allocation2] sm:$0xff]
          %v419 = vrot.slane %v418, 4
          %v420 = vadd.f32 %v418, %v419
          %v421 = vrot.slane %v420, 2
          %v422 = vadd.f32 %v420, %v421
          %v423 = vrot.slane %v422, 1
          %v424 = vadd.f32 %v422, %v423
          %v425 = vld [vmem:[#allocation3] sm:$0xff]
          %v426 = vrot.slane %v425, 4
          %v427 = vadd.f32 %v425, %v426
          %v428 = vrot.slane %v427, 2
          %v429 = vadd.f32 %v427, %v428
          %v430 = vrot.slane %v429, 1
          %v431 = vadd.f32 %v429, %v430
          %v432 = vmul.f32 %v424, 0.0625
          %v433 = vmul.f32 %v431, 0.0625
          %v434 = vmul.f32 %v432, %v432
          %v435 = vsub.f32 %v433, %v434
          %v436 = vmax.f32 %v435, 0.0
          %v437 = vadd.f32 %v436, 1e-05
          %v438 = vrsqrt.pop %v437
          %v439 = vmul.f32 %v438, %v437
          %v440 = vmul.f32 %v439, %v438
          %v441 = vmul.f32 0.5, %v440
          %v442 = vsub.f32 1.5, %v441
          %v443 = vmul.f32 %v438, %v442
          %vm444 = vweird.f32 %v437
          %vm445 = vweird.f32 %v438
          %vm446 = vmor %vm444, %vm445
          %v447 = vsel %vm446, %v438, %v443
          %v448 = vld [vmem:[%s4] sm:$0x1]
          %v449 = vmul.f32 %v448, %v447
          %450 = vst [vmem:[#allocation4] sm:$0x1] %v449
          %v451 = vld [vmem:[%s5] sm:$0x1]
          %v452 = vmul.f32 %v432, %v449
          %v453 = vsub.f32 %v451, %v452
          %454 = vst [vmem:[#allocation5] sm:$0x1] %v453
        $region56: #{tpu_custom_call.1} parent=43 // pred_fallthru
          _
        // Predicated region
        $region57: #{tpu_custom_call.1} parent=43 // pred_check
          %p455 = pneg %p413
        $region58: #{tpu_custom_call.1} parent=43 // pred_check_branch
          %457 = sbr.rel (%p455) target = $region60
        $region59: #{tpu_custom_call.1} parent=43 // pred_region
          %s458 = smul.u32 %s25, 16
          %s459 = scalar_lea.vmem [#allocation6], %s458
          %v460 = vld [vmem:[%s459] sm:$0xff]
          %v461 = vld [vmem:[%s459 + $0x8] sm:$0xff]
          %v462 = vld [vmem:[#allocation4] sm:$0x1]
          %v464 = vperm.slane %v462, 0
          %v466 = vmul.f32 %v460, %v464
          %v467 = vmul.f32 %v461, %v464
          %v468 = vld [vmem:[#allocation5] sm:$0x1]
          %v470 = vperm.slane %v468, 0
          %v472 = vadd.f32 %v466, %v470
          %v473 = vadd.f32 %v467, %v470
          %v474 = vmax.f32 %v472, 0.0
          %v475 = vmax.f32 %v473, 0.0
          %476 = vst [vmem:[%s295] sm:$0xff] %v474
          %477 = vst [vmem:[%s295 + $0x8] sm:$0xff] %v475
        $region60: #{tpu_custom_call.1} parent=43 // pred_fallthru
          _
        %s478 = sand.u32 %s186, 1
        %s479 = scalar_lea.sflag [#allocation8], %s478
        %s480 = sand.u32 %s186, 1
        %s481 = smul.addr %s480, 16
        %s482 = scalar_lea.vmem [#allocation7], %s481
        // Predicated region
        $region61: #{tpu_custom_call.1} parent=43 // pred_check
          %p483 = pneg %p196
        $region62: #{tpu_custom_call.1} parent=43 // pred_check_branch
          %485 = sbr.rel (%p483) target = $region64
        $region63: #{tpu_custom_call.1} parent=43 // pred_region
          %s486 = smul.u32 %s25, %s24
          %s487 = smul.u32 2, %s486
          %489 = vsyncadd %s479, 0
          %s490 = smul.addr %s487, 8
          %s491 = scalar_lea.hbm %s6, %s490
          %s492 = sshll.u32 %s482, 4
          %s493 = int_to_ptr.vmem [resolvable:$true] %s492
          %s494 = sshll.u32 %s491, 4
          %s495 = int_to_ptr.hbm [resolvable:$true] %s494
          %500 = dma.vmem_to_hbm [thread:$0]  %s493, 256, %s495, %s479, 128, 128, 8
        $region64: #{tpu_custom_call.1} parent=43 // pred_fallthru
          _
      $region44: #{tpu_custom_call.1} parent=5 // pred_fallthru
        _
      %p501 = scmp.le.s32.totalorder 2, %s15
      // Predicated region
      $region65: #{tpu_custom_call.1} parent=5 // pred_check
        %p502 = pneg %p501
      $region66: #{tpu_custom_call.1} parent=5 // pred_check_branch
        %504 = sbr.rel (%p502) target = $region68
      $region67: #{tpu_custom_call.1} parent=5 // pred_region
        %s505 = ssub.s32 %s15, 2
        // Predicated region
        $region69: #{tpu_custom_call.1} parent=67 // pred_check
          %p506 = pneg %p202
        $region70: #{tpu_custom_call.1} parent=67 // pred_check_branch
          %508 = sbr.rel (%p506) target = $region72
        $region71: #{tpu_custom_call.1} parent=67 // pred_region
          %s509 = sand.u32 %s187, 1
          %s510 = scalar_lea.sflag [#allocation8], %s509
          %s511 = sand.u32 %s187, 1
          %s512 = smul.addr %s511, 16
          %s513 = scalar_lea.vmem [#allocation7], %s512
          %515 = dma.done %s510, 256
        $region72: #{tpu_custom_call.1} parent=67 // pred_fallthru
          _
      $region68: #{tpu_custom_call.1} parent=5 // pred_fallthru
        _
    $region6: #{tpu_custom_call.1} parent=1 // loop_footer
      %s19 = sadd.s32 1, %s15
    $region7: #{tpu_custom_call.1} parent=1 // loop_footer_branch
      %14 = sbr.rel target = $region3
    $region8: #{tpu_custom_call.1} parent=1 // loop_exit
      _
    %516 = vsyncpa [#allocation8], 1
    %s517 = scalar_lea.sflag [#allocation8], 1
    %518 = vsyncpa %s517, 1

</llo_original>
